<compile_context>
chip_gen: v7x
topology: tpu7x:2x2x1
jax: 0.10.0
libtpu: 0.0.40
codegen_flags: <defaults>
</compile_context>

<pallas_src>
import functools

import jax
import jax.numpy as jnp
from jax.experimental import pallas as pl
from jax.experimental.pallas import tpu as pltpu


def _layernorm_kernel(x_ref, alpha_ref, beta_ref, o_ref, *, eps, d_model, groups):
    x = x_ref[...].astype(jnp.float32)            # (tr, groups * d_model)
    alpha = alpha_ref[...]                        # (1, groups * d_model), f32
    beta = beta_ref[...]                          # (1, groups * d_model), f32

    tr = x.shape[0]
    xg = x.reshape(tr, groups, d_model) if groups > 1 else x

    inv_d = jnp.float32(1.0 / d_model)
    inv_dm1 = jnp.float32(1.0 / (d_model - 1)) if d_model > 1 else jnp.float32(0.0)

    # Two-pass (centered) moments: numerically safer than sumsq - d*mean^2 and
    # still fully hidden under the HBM DMA in this memory-bound kernel.
    mean = jnp.sum(xg, axis=-1, keepdims=True) * inv_d
    xc = xg - mean
    var = jnp.sum(xc * xc, axis=-1, keepdims=True) * inv_dm1      # unbiased (ddof=1)
    std = jnp.sqrt(var)
    inv = jax.lax.rsqrt(std + jnp.float32(eps))   # faithful: 1 / sqrt(std + eps)

    y = xc * inv
    if groups > 1:
        y = y.reshape(tr, groups * d_model)
    o_ref[...] = (alpha * y + beta).astype(o_ref.dtype)


def _round_up(x, m):
    return (x + m - 1) // m * m


def _vmem_budget():
    # Generation-aware budgets: v5e/v6e = 128 MiB VMEM/TC, v7x = 64 MiB/TC.
    try:
        cap = int(pltpu.get_tpu_info().vmem_capacity_bytes)
    except Exception:
        cap = 64 * 1024 * 1024                    # conservative fallback (v7x-sized)
    target_block_bytes = min(8 << 20, max(2 << 20, cap // 16))
    vmem_limit_bytes = max(32 << 20, min(cap * 3 // 4, 112 << 20))
    return target_block_bytes, vmem_limit_bytes


def _pick_tile_rows(rows, width, itemsize, target_bytes):
    """Rows per block: sized by bytes (f32 working set accounted), sublane-aligned,
    with an even / balanced grid for 2-TC parts when it costs nothing."""
    mult = 8 if itemsize >= 4 else 16
    work_bytes_per_row = max(1, width * max(itemsize, 4))   # account f32 upcast
    io_bytes_per_row = max(1, width * itemsize)

    tr = max(mult, (target_bytes // work_bytes_per_row) // mult * mult)
    if tr >= rows:
        # Whole input fits in one target-sized block; split in two only if each
        # half still moves >= ~1 MiB of HBM traffic (v7x 2-TC balance).
        if rows >= 2 * mult and rows * io_bytes_per_row >= (2 << 20):
            half = _round_up(pl.cdiv(rows, 2), mult)
            if half < rows:
                return half
        return rows

    steps = pl.cdiv(rows, tr)
    if steps % 2 == 1:
        alt = _round_up(pl.cdiv(rows, steps + 1), mult)
        if alt >= mult and alt * io_bytes_per_row >= (1 << 20):
            tr = alt
    return tr


def layer_normalization(x, alpha, beta, eps=1e-6, tile_rows=None):
    """x: (..., d_model); alpha, beta: (d_model,). Returns same shape/dtype as x."""
    orig_shape = x.shape
    d_model = orig_shape[-1]
    rows = 1
    for s in orig_shape[:-1]:
        rows *= s
    if rows == 0 or d_model == 0:
        return x

    # Lane-dense fold: for narrow d_model pack g = 128 // d_model rows side by side
    # so every vreg / XLU reduce / output store uses the full 128-lane width.
    groups = 1
    if d_model < 128 and 128 % d_model == 0:
        g = 128 // d_model
        if g > 1 and rows % g == 0:
            groups = g
    width = groups * d_model
    rows_eff = rows // groups

    x2 = x.reshape(rows_eff, width)
    alpha2 = jnp.tile(alpha.astype(jnp.float32), groups).reshape(1, width)
    beta2 = jnp.tile(beta.astype(jnp.float32), groups).reshape(1, width)

    itemsize = jnp.dtype(x.dtype).itemsize
    target_bytes, vmem_limit = _vmem_budget()
    if tile_rows is None:
        tr = _pick_tile_rows(rows_eff, width, itemsize, target_bytes)
    else:
        tr = max(1, min(tile_rows, rows_eff))

    grid = (pl.cdiv(rows_eff, tr),)
    kernel = functools.partial(_layernorm_kernel, eps=eps, d_model=d_model,
                               groups=groups)

    # No wrapper-side pad/slice: boundary blocks are read-padded / write-masked by
    # Pallas; garbage rows never contaminate valid rows (all math is row-local).
    out = pl.pallas_call(
        kernel,
        out_shape=jax.ShapeDtypeStruct((rows_eff, width), x.dtype),
        grid_spec=pltpu.PrefetchScalarGridSpec(
            num_scalar_prefetch=0,
            grid=grid,
            in_specs=[
                pl.BlockSpec((tr, width), lambda i: (i, 0)),
                pl.BlockSpec((1, width), lambda i: (0, 0)),
                pl.BlockSpec((1, width), lambda i: (0, 0)),
            ],
            out_specs=pl.BlockSpec((tr, width), lambda i: (i, 0)),
        ),
        compiler_params=pltpu.CompilerParams(
            dimension_semantics=("parallel",),
            vmem_limit_bytes=vmem_limit,
        ),
    )(x2, alpha2, beta2)

    return out.reshape(orig_shape)


if __name__ == "__main__":
    batch, seq, d_model = 2, 8, 32
    key = jax.random.PRNGKey(0)
    x = jax.random.normal(key, (batch, seq, d_model), dtype=jnp.float32)

    # Deterministic parameter init, matching nn.Parameter(torch.ones/zeros(d_model)).
    alpha = jnp.ones((d_model,), dtype=jnp.float32)
    beta = jnp.zeros((d_model,), dtype=jnp.float32)

    out = layer_normalization(x, alpha, beta, eps=1e-6)
    out = jax.block_until_ready(out)

    # Pure-JAX reference (same math as the PyTorch module: unbiased std, sqrt(std+eps)).
    mean = jnp.mean(x, axis=-1, keepdims=True)
    std = jnp.sqrt(jnp.sum((x - mean) ** 2, axis=-1, keepdims=True) / (d_model - 1))
    ref = alpha * (x - mean) / jnp.sqrt(std + 1e-6) + beta
    assert jnp.allclose(out, ref, atol=1e-5, rtol=1e-5)

    print("KERNEL_OK")
</pallas_src>

<mosaic_0001>
module attributes {stable_mosaic.version = 11 : i64} {
  func.func @_layernorm_kernel(%arg0: i32, %arg1: memref<4x128xf32, #tpu.memory_space<vmem>>, %arg2: memref<1x128xf32, #tpu.memory_space<vmem>>, %arg3: memref<1x128xf32, #tpu.memory_space<vmem>>, %arg4: memref<4x128xf32, #tpu.memory_space<vmem>>) attributes {dimension_semantics = [#tpu.dimension_semantics<parallel>], iteration_bounds = array<i64: 1>, scalar_prefetch = 0 : i64, scratch_operands = 0 : i64, tpu.core_type = #tpu.core_type<tc>, window_params = [{transform_indices = @transform_0, window_bounds = array<i64: 4, 128>}, {pipeline_mode = #tpu.pipeline_mode<synchronous>, transform_indices = @transform_1, window_bounds = array<i64: 1, 128>}, {pipeline_mode = #tpu.pipeline_mode<synchronous>, transform_indices = @transform_2, window_bounds = array<i64: 1, 128>}, {transform_indices = @transform_3, window_bounds = array<i64: 4, 128>}]} {
    %c0 = arith.constant 0 : index
    %c0_0 = arith.constant 0 : index
    %0 = vector.load %arg1[%c0, %c0_0] : memref<4x128xf32, #tpu.memory_space<vmem>>, vector<4x128xf32>
    %c0_1 = arith.constant 0 : index
    %c0_2 = arith.constant 0 : index
    %1 = vector.load %arg2[%c0_1, %c0_2] : memref<1x128xf32, #tpu.memory_space<vmem>>, vector<1x128xf32>
    %c0_3 = arith.constant 0 : index
    %c0_4 = arith.constant 0 : index
    %2 = vector.load %arg3[%c0_3, %c0_4] : memref<1x128xf32, #tpu.memory_space<vmem>>, vector<1x128xf32>
    %3 = vector.shape_cast %0 : vector<4x128xf32> to vector<4x4x32xf32>
    %cst = arith.constant dense<0.000000e+00> : vector<4x4xf32>
    %4 = vector.multi_reduction <add>, %3, %cst [2] : vector<4x4x32xf32> to vector<4x4xf32>
    %5 = vector.shape_cast %4 : vector<4x4xf32> to vector<4x4x1xf32>
    %cst_5 = arith.constant 3.125000e-02 : f32
    %6 = vector.broadcast %cst_5 : f32 to vector<4x4x1xf32>
    %7 = arith.mulf %5, %6 : vector<4x4x1xf32>
    %8 = vector.broadcast %7 : vector<4x4x1xf32> to vector<4x4x32xf32>
    %9 = arith.subf %3, %8 : vector<4x4x32xf32>
    %10 = arith.mulf %9, %9 : vector<4x4x32xf32>
    %cst_6 = arith.constant dense<0.000000e+00> : vector<4x4xf32>
    %11 = vector.multi_reduction <add>, %10, %cst_6 [2] : vector<4x4x32xf32> to vector<4x4xf32>
    %12 = vector.shape_cast %11 : vector<4x4xf32> to vector<4x4x1xf32>
    %cst_7 = arith.constant 0.0322580636 : f32
    %13 = vector.broadcast %cst_7 : f32 to vector<4x4x1xf32>
    %14 = arith.mulf %12, %13 : vector<4x4x1xf32>
    %15 = math.sqrt %14 : vector<4x4x1xf32>
    %cst_8 = arith.constant 9.99999997E-7 : f32
    %16 = vector.broadcast %cst_8 : f32 to vector<4x4x1xf32>
    %17 = arith.addf %15, %16 : vector<4x4x1xf32>
    %18 = math.rsqrt %17 : vector<4x4x1xf32>
    %19 = vector.broadcast %18 : vector<4x4x1xf32> to vector<4x4x32xf32>
    %20 = arith.mulf %9, %19 : vector<4x4x32xf32>
    %21 = vector.shape_cast %20 : vector<4x4x32xf32> to vector<4x128xf32>
    %22 = vector.broadcast %1 : vector<1x128xf32> to vector<4x128xf32>
    %23 = arith.mulf %22, %21 : vector<4x128xf32>
    %24 = vector.broadcast %2 : vector<1x128xf32> to vector<4x128xf32>
    %25 = arith.addf %23, %24 : vector<4x128xf32>
    %c0_9 = arith.constant 0 : index
    %c0_10 = arith.constant 0 : index
    %26 = vector.load %arg4[%c0_9, %c0_10] : memref<4x128xf32, #tpu.memory_space<vmem>>, vector<4x128xf32>
    tpu.vector_store %arg4[%c0_9, %c0_10], %25 {strides = array<i32>} : memref<4x128xf32, #tpu.memory_space<vmem>>, vector<4x128xf32>,
    return
  }
  func.func @transform_0(%arg0: i32) -> (i32, i32) {
    %c0_i32 = arith.constant 0 : i32
    %c0_i32_0 = arith.constant 0 : i32
    return %arg0, %c0_i32 : i32, i32
  }
  func.func @transform_1(%arg0: i32) -> (i32, i32) {
    %c0_i32 = arith.constant 0 : i32
    %c0_i32_0 = arith.constant 0 : i32
    %c0_i32_1 = arith.constant 0 : i32
    return %c0_i32, %c0_i32_0 : i32, i32
  }
  func.func @transform_2(%arg0: i32) -> (i32, i32) {
    %c0_i32 = arith.constant 0 : i32
    %c0_i32_0 = arith.constant 0 : i32
    %c0_i32_1 = arith.constant 0 : i32
    return %c0_i32, %c0_i32_0 : i32, i32
  }
  func.func @transform_3(%arg0: i32) -> (i32, i32) {
    %c0_i32 = arith.constant 0 : i32
    %c0_i32_0 = arith.constant 0 : i32
    return %arg0, %c0_i32 : i32, i32
  }
}

</mosaic_0001>

<llo_original>
// kernel: tpu_custom_call.1
$region0: #{tpu_custom_call.1}
  #allocation0 [shape = 'u32[]', space=smem, size = 0x4, offset = 0x4, fixed_abs, tag = 'smem constant byte address 0x4 - core index']
  #allocation1 [shape = 'u32[144,128]{1,0:T(1,128)}', space=vmem, size = 0x12000, scoped, tag = 'internal scratch']
  %s0 = inlined_call_operand.hbm [shape: f32[4,128], index: 0, kind: input, shape index: {}]
  %s1 = inlined_call_operand.vmem [shape: f32[1,128], index: 1, kind: input, shape index: {}]
  %s2 = inlined_call_operand.vmem [shape: f32[1,128], index: 2, kind: input, shape index: {}]
  %s3 = inlined_call_operand.hbm [shape: f32[4,128], index: 3, kind: output, shape index: {}]
  %s4 = sld [smem:[#allocation0]]
  $region26: #{tpu_custom_call.1} parent=0
    _
  %s6 = ssub.s32 1, %s4
  %s7 = scalar_select 0, %s6, %s4
  $region1: #{tpu_custom_call.1} parent=0
    #allocation2 [shape = 'u8[2048]{0}', space=vmem, size = 0x800, scoped, tag = 'input window, operand 0, single buffered']
    #allocation3 [shape = 's32[1]{0}', space=sflag, size = 0x4, scoped, tag = 'scoped memory for tpu_custom_call.1']
    #allocation4 [shape = 's32[1]{0}', space=sflag, size = 0x4, scoped, tag = 'scoped memory for tpu_custom_call.1']
    #allocation5 [shape = 'u8[2048]{0}', space=vmem, size = 0x800, scoped, tag = 'output window, operand 0, single buffered']
    %8 = vsyncpa [#allocation3], 0
    %9 = vsyncpa [#allocation4], 0
    // Predicated region
    $region2: #{tpu_custom_call.1} parent=1 // pred_check
      _
    $region3: #{tpu_custom_call.1} parent=1 // pred_check_branch
      %11 = sbr.rel (0) target = $region5
    $region4: #{tpu_custom_call.1} parent=1 // pred_region
      %s13 = ssub.s32 64, 64
      %14 = vsyncadd [#allocation3], %s13
      %s16 = sshll.u32 [#allocation2], 4
      %s17 = int_to_ptr.vmem [resolvable:$true] %s16
      %19 = dma.hbm_to_vmem [thread:$0]  %s0, 64, %s17, [#allocation3]
    $region5: #{tpu_custom_call.1} parent=1 // pred_fallthru
      _
    // Predicated region
    $region6: #{tpu_custom_call.1} parent=1 // pred_check
      _
    $region7: #{tpu_custom_call.1} parent=1 // pred_check_branch
      %21 = sbr.rel (0) target = $region9
    $region8: #{tpu_custom_call.1} parent=1 // pred_region
      _
    $region9: #{tpu_custom_call.1} parent=1 // pred_fallthru
      _
    // Predicated region
    $region10: #{tpu_custom_call.1} parent=1 // pred_check
      _
    $region11: #{tpu_custom_call.1} parent=1 // pred_check_branch
      %23 = sbr.rel (0) target = $region13
    $region12: #{tpu_custom_call.1} parent=1 // pred_region
      _
    $region13: #{tpu_custom_call.1} parent=1 // pred_fallthru
      _
    // Predicated region
    $region14: #{tpu_custom_call.1} parent=1 // pred_check
      _
    $region15: #{tpu_custom_call.1} parent=1 // pred_check_branch
      %25 = sbr.rel (0) target = $region17
    $region16: #{tpu_custom_call.1} parent=1 // pred_region
      %26 = dma.done [#allocation3], 64
    $region17: #{tpu_custom_call.1} parent=1 // pred_fallthru
      _
    %v27 = vld [vmem:[#allocation2] sm:$0xf]
    %v28 = vld [vmem:[%s1] sm:$0x1]
    %v29 = vld [vmem:[%s2] sm:$0x1]
    %31 = vrot.lane.b32.xlu0 %v27, 96
    %v32 = vpop.permute.xlu0 %31
    %34 = vrot.lane.b32.xlu0 %v27, 64
    %v35 = vpop.permute.xlu0 %34
    %37 = vrot.lane.b32.xlu0 %v27, 32
    %v38 = vpop.permute.xlu0 %37
    %v40 = vcombine.low %v27, %v35
    %v42 = vunpack.c.l.s4 1983009808
    %v43 = vunpack.c.0.s8 %v42
    %v44 = vlaneseq
    %v45 = vshrl.u32 %v44, 7
    %v46 = vsub.s32 %v43, %v45
    %v47 = vrot.slane %v40, %v46
    %v48 = vcombine.low %v32, %v38
    %v50 = vunpack.c.l.s4 1983009808
    %v51 = vunpack.c.0.s8 %v50
    %v52 = vlaneseq
    %v53 = vshrl.u32 %v52, 7
    %v54 = vsub.s32 %v51, %v53
    %v55 = vrot.slane %v48, %v54
    %v56 = vcombine.low %v47, %v55
    %v57 = vcombine.high %v47, %v55
    %v59 = vunpack.c.l.s4 1934713408
    %v60 = vunpack.c.0.s8 %v59
    %v61 = vlaneseq
    %v62 = vshrl.u32 %v61, 7
    %v63 = vsub.s32 %v60, %v62
    %v64 = vrot.slane %v56, %v63
    %v66 = vunpack.c.l.s4 1934713408
    %v67 = vunpack.c.0.s8 %v66
    %v68 = vlaneseq
    %v69 = vshrl.u32 %v68, 7
    %v70 = vsub.s32 %v67, %v69
    %v71 = vrot.slane %v57, %v70
    %v72 = vcombine.high %v64, 0.0
    %v73 = vcombine.high %v71, 0.0
    %vm74 = vcmask 257024
    %v75 = vsel %vm74, %v64, 0.0
    %76 = vadd.xlane.f32.xlu0 %v75
    %v77 = vpop.xlane.xlu0 %76
    %v78 = vsel %vm74, %v72, 0.0
    %79 = vadd.xlane.f32.xlu0 %v78
    %v80 = vpop.xlane.xlu0 %79
    %v81 = vsel %vm74, %v71, 0.0
    %82 = vadd.xlane.f32.xlu0 %v81
    %v83 = vpop.xlane.xlu0 %82
    %v84 = vsel %vm74, %v73, 0.0
    %85 = vadd.xlane.f32.xlu0 %v84
    %v86 = vpop.xlane.xlu0 %85
    %v87 = vmul.f32 %v77, 0.03125
    %v88 = vmul.f32 %v80, 0.03125
    %v89 = vmul.f32 %v83, 0.03125
    %v90 = vmul.f32 %v86, 0.03125
    %v91 = vsub.f32 %v64, %v87
    %v92 = vsub.f32 %v72, %v88
    %v93 = vsub.f32 %v71, %v89
    %v94 = vsub.f32 %v73, %v90
    %v95 = vmul.f32 %v91, %v91
    %v96 = vmul.f32 %v92, %v92
    %v97 = vmul.f32 %v93, %v93
    %v98 = vmul.f32 %v94, %v94
    %v99 = vsel %vm74, %v95, 0.0
    %100 = vadd.xlane.f32.xlu0 %v99
    %v101 = vpop.xlane.xlu0 %100
    %v102 = vsel %vm74, %v96, 0.0
    %103 = vadd.xlane.f32.xlu0 %v102
    %v104 = vpop.xlane.xlu0 %103
    %v105 = vsel %vm74, %v97, 0.0
    %106 = vadd.xlane.f32.xlu0 %v105
    %v107 = vpop.xlane.xlu0 %106
    %v108 = vsel %vm74, %v98, 0.0
    %109 = vadd.xlane.f32.xlu0 %v108
    %v110 = vpop.xlane.xlu0 %109
    %v111 = vmul.f32 %v101, 0.032258064
    %v112 = vmul.f32 %v104, 0.032258064
    %v113 = vmul.f32 %v107, 0.032258064
    %v114 = vmul.f32 %v110, 0.032258064
    %v115 = vrsqrt.pop %v111
    %v116 = vmul.f32 %v111, %v115
    %vm117 = vcmp.eq.f32.partialorder %v111, inf
    %v118 = vsel %vm117, %v111, %v116
    %vm119 = vcmp.eq.f32.partialorder %v111, 0.0
    %v120 = vand.u32 %v111, 2147483648
    %v121 = vsel %vm119, %v120, %v118
    %v122 = vrsqrt.pop %v112
    %v123 = vmul.f32 %v112, %v122
    %vm124 = vcmp.eq.f32.partialorder %v112, inf
    %v125 = vsel %vm124, %v112, %v123
    %vm126 = vcmp.eq.f32.partialorder %v112, 0.0
    %v127 = vand.u32 %v112, 2147483648
    %v128 = vsel %vm126, %v127, %v125
    %v129 = vrsqrt.pop %v113
    %v130 = vmul.f32 %v113, %v129
    %vm131 = vcmp.eq.f32.partialorder %v113, inf
    %v132 = vsel %vm131, %v113, %v130
    %vm133 = vcmp.eq.f32.partialorder %v113, 0.0
    %v134 = vand.u32 %v113, 2147483648
    %v135 = vsel %vm133, %v134, %v132
    %v136 = vrsqrt.pop %v114
    %v137 = vmul.f32 %v114, %v136
    %vm138 = vcmp.eq.f32.partialorder %v114, inf
    %v139 = vsel %vm138, %v114, %v137
    %vm140 = vcmp.eq.f32.partialorder %v114, 0.0
    %v141 = vand.u32 %v114, 2147483648
    %v142 = vsel %vm140, %v141, %v139
    %v143 = vadd.f32 %v121, 1e-06
    %v144 = vadd.f32 %v128, 1e-06
    %v145 = vadd.f32 %v135, 1e-06
    %v146 = vadd.f32 %v142, 1e-06
    %v147 = vrsqrt.pop %v143
    %v148 = vrsqrt.pop %v144
    %v149 = vrsqrt.pop %v145
    %v150 = vrsqrt.pop %v146
    %v151 = vmul.f32 %v91, %v147
    %v152 = vmul.f32 %v92, %v148
    %v153 = vmul.f32 %v93, %v149
    %v154 = vmul.f32 %v94, %v150
    %v155 = vcombine.low %v151, %v153
    %v157 = vunpack.c.l.s4 1983009808
    %v158 = vunpack.c.0.s8 %v157
    %v159 = vlaneseq
    %v160 = vshrl.u32 %v159, 7
    %v161 = vsub.s32 %v158, %v160
    %v162 = vrot.slane %v155, %v161
    %v163 = vcombine.low %v152, %v154
    %v165 = vunpack.c.l.s4 1983009808
    %v166 = vunpack.c.0.s8 %v165
    %v167 = vlaneseq
    %v168 = vshrl.u32 %v167, 7
    %v169 = vsub.s32 %v166, %v168
    %v170 = vrot.slane %v163, %v169
    %v171 = vcombine.low %v162, %v170
    %v172 = vcombine.high %v162, %v170
    %v174 = vunpack.c.l.s4 1934713408
    %v175 = vunpack.c.0.s8 %v174
    %v176 = vlaneseq
    %v177 = vshrl.u32 %v176, 7
    %v178 = vsub.s32 %v175, %v177
    %v179 = vrot.slane %v171, %v178
    %v181 = vunpack.c.l.s4 1934713408
    %v182 = vunpack.c.0.s8 %v181
    %v183 = vlaneseq
    %v184 = vshrl.u32 %v183, 7
    %v185 = vsub.s32 %v182, %v184
    %v186 = vrot.slane %v172, %v185
    %v187 = vcombine.high %v179, 0.0
    %v188 = vcombine.high %v186, 0.0
    %190 = vrot.lane.b32.xlu0 %v187, 32
    %v191 = vpop.permute.xlu0 %190
    %194 = vrot.lane.b32.xlu0 %v186, 64
    %v195 = vpop.permute.xlu0 %194
    %198 = vrot.lane.b32.xlu0 %v188, 96
    %v199 = vpop.permute.xlu0 %198
    %vm201 = vcmask 261120
    %v202 = vsel %vm201, %v179, %v191
    %vm203 = vcmask 523264
    %v204 = vsel %vm203, %v202, %v195
    %vm205 = vcmask 785408
    %v206 = vsel %vm205, %v204, %v199
    %v208 = vlaneseq
    %v209 = vshrl.u32 %v208, 7
    %v210 = vsub.s32 0, %v209
    %v211 = vrot.slane %v28, %v210
    %v213 = vmul.f32 %v211, %v206
    %v215 = vlaneseq
    %v216 = vshrl.u32 %v215, 7
    %v217 = vsub.s32 0, %v216
    %v218 = vrot.slane %v29, %v217
    %v220 = vadd.f32 %v213, %v218
    %221 = vst [vmem:[#allocation5] sm:$0xf] %v220
    // Predicated region
    $region18: #{tpu_custom_call.1} parent=1 // pred_check
      _
    $region19: #{tpu_custom_call.1} parent=1 // pred_check_branch
      %223 = sbr.rel (0) target = $region21
    $region20: #{tpu_custom_call.1} parent=1 // pred_region
      %s225 = ssub.s32 64, 64
      %226 = vsyncadd [#allocation4], %s225
      %s228 = sshll.u32 [#allocation5], 4
      %s229 = int_to_ptr.vmem [resolvable:$true] %s228
      %231 = dma.vmem_to_hbm [thread:$0]  %s229, 64, %s3, [#allocation4]
    $region21: #{tpu_custom_call.1} parent=1 // pred_fallthru
      _
    // Predicated region
    $region22: #{tpu_custom_call.1} parent=1 // pred_check
      _
    $region23: #{tpu_custom_call.1} parent=1 // pred_check_branch
      %233 = sbr.rel (0) target = $region25
    $region24: #{tpu_custom_call.1} parent=1 // pred_region
      %234 = dma.done [#allocation4], 64
    $region25: #{tpu_custom_call.1} parent=1 // pred_fallthru
      _
    %235 = vsyncpa [#allocation3], 1
    %236 = vsyncpa [#allocation4], 1

</llo_original>
